<compile_context>
chip_gen: v6e
topology: v6e:2x2x1
jax: 0.10.0
libtpu: 0.0.40
codegen_flags: <defaults>
</compile_context>

<pallas_src>
import jax
import jax.numpy as jnp
from jax.experimental import pallas as pl
from jax.experimental.pallas import tpu as pltpu


def _cdiv(a, b):
    return -(-a // b)


def _round_up(a, m):
    return _cdiv(a, m) * m


def _normalization_kernel(scale_ref, bias_ref, img_ref, out_ref):
    # scale_ref / bias_ref : (C,) f32 scalars in SMEM (scalar prefetch).
    # img_ref  / out_ref   : (tb, tr, L) VMEM tile of a single channel (C squeezed).
    c = pl.program_id(2)  # channel axis is always the last grid axis
    x = img_ref[...].astype(jnp.float32)
    out_ref[...] = (x * scale_ref[c] + bias_ref[c]).astype(out_ref.dtype)


def normalization(img, mean, std):
    """(img - mean.view(-1,1,1)) / std.view(-1,1,1) for NCHW (or CHW) images."""
    squeeze_batch = img.ndim == 3
    if squeeze_batch:
        img = img[None]
    B, C, H, W = img.shape
    S = H * W

    # PyTorch promotes integer images to float via the float mean/std buffers.
    if not jnp.issubdtype(img.dtype, jnp.floating):
        img = img.astype(jnp.float32)
    out_dtype = img.dtype

    mean = jnp.asarray(mean, dtype=jnp.float32).reshape(-1)
    std = jnp.asarray(std, dtype=jnp.float32).reshape(-1)
    if mean.shape[0] == 1:
        mean = jnp.broadcast_to(mean, (C,))
    if std.shape[0] == 1:
        std = jnp.broadcast_to(std, (C,))
    scale = 1.0 / std                 # (C,)
    bias = -mean * scale              # (C,)   =>  out = x * scale + bias

    # --- Layout: (B, C, S) -> pad -> (B, C, R, L); lane dim L is a 128-multiple. ---
    L = min(_round_up(S, 128), 1024)
    R = _cdiv(S, L)
    S_pad = R * L
    img2 = img.reshape(B, C, S)
    if S_pad != S:
        img2 = jnp.pad(img2, ((0, 0), (0, 0), (0, S_pad - S)))
    img4 = img2.reshape(B, C, R, L)

    # --- Tiles: dtype-aware sublane alignment, ~4 MiB (f32-equivalent) per buffer. ---
    itemsize = jnp.dtype(img.dtype).itemsize
    sub_align = {1: 32, 2: 16}.get(itemsize, 8)
    budget_elems = (4 * 1024 * 1024) // 4                      # 1M elems (as-if f32)
    max_rows = max(sub_align, (budget_elems // L) // sub_align * sub_align)

    if R <= sub_align:
        tr = R                                                 # full dim (alignment-exempt)
    else:
        tr = min(max_rows, (R // sub_align) * sub_align)       # aligned, <= R
    grid_r = _cdiv(R, tr)
    if grid_r > 1:                                             # rebalance row blocks
        tr = min(tr, _round_up(_cdiv(R, grid_r), sub_align))
        grid_r = _cdiv(R, tr)

    if grid_r == 1:                  # whole image's rows fit one block: add batch rows
        tb = min(B, max(1, budget_elems // (tr * L)))
        tb = _cdiv(B, _cdiv(B, tb))                            # rebalance batch blocks
    else:
        tb = 1
    grid_b = _cdiv(B, tb)

    # --- Grid: biggest axis first (even v7x megacore split), tiny C last. ---
    if grid_b >= grid_r:
        grid = (grid_b, grid_r, C)
        idx_map = lambda b, r, c, *_: (b, c, r, 0)
    else:
        grid = (grid_r, grid_b, C)
        idx_map = lambda r, b, c, *_: (b, c, r, 0)

    block = (tb, None, tr, L)        # channel dim squeezed -> kernel sees (tb, tr, L)
    out = pl.pallas_call(
        _normalization_kernel,
        out_shape=jax.ShapeDtypeStruct((B, C, R, L), out_dtype),
        grid_spec=pltpu.PrefetchScalarGridSpec(
            num_scalar_prefetch=2,
            grid=grid,
            in_specs=[pl.BlockSpec(block, idx_map)],
            out_specs=pl.BlockSpec(block, idx_map),
        ),
        compiler_params=pltpu.CompilerParams(
            dimension_semantics=("parallel", "parallel", "parallel"),
            vmem_limit_bytes=32 * 1024 * 1024,
        ),
    )(scale, bias, img4)

    out = out.reshape(B, C, S_pad)
    if S_pad != S:
        out = out[:, :, :S]
    out = out.reshape(B, C, H, W)
    if squeeze_batch:
        out = out[0]
    return out


if __name__ == "__main__":
    # Deterministic module parameters (shape (C,), viewed as (C,1,1) by the module).
    C = 4
    mean = jnp.array([0.485, 0.456, 0.406, 0.5], dtype=jnp.float32)
    std = jnp.array([0.229, 0.224, 0.225, 0.25], dtype=jnp.float32)

    # Deterministic small NCHW input.
    key = jax.random.PRNGKey(0)
    img = jax.random.uniform(key, (2, C, 16, 16), dtype=jnp.float32)

    out = jax.block_until_ready(normalization(img, mean, std))

    # Reference check (plain JAX broadcasting, mirrors PyTorch semantics).
    ref = (img - mean.reshape(-1, 1, 1)) / std.reshape(-1, 1, 1)
    assert out.shape == img.shape and out.dtype == img.dtype
    assert jnp.allclose(out, ref, atol=1e-5, rtol=1e-5)

    print("KERNEL_OK")
</pallas_src>

<mosaic_0001>
module attributes {stable_mosaic.version = 11 : i64} {
  func.func @_normalization_kernel(%arg0: i32, %arg1: i32, %arg2: i32, %arg3: memref<4xf32, #tpu.memory_space<smem>>, %arg4: memref<4xf32, #tpu.memory_space<smem>>, %arg5: memref<2x1x1x256xf32, #tpu.memory_space<vmem>>, %arg6: memref<2x1x1x256xf32, #tpu.memory_space<vmem>>) attributes {dimension_semantics = [#tpu.dimension_semantics<parallel>, #tpu.dimension_semantics<parallel>, #tpu.dimension_semantics<parallel>], iteration_bounds = array<i64: 1, 1, 4>, scalar_prefetch = 2 : i64, scratch_operands = 0 : i64, tpu.core_type = #tpu.core_type<tc>, window_params = [{transform_indices = @transform_0, window_bounds = array<i64: 2, 1, 1, 256>}, {transform_indices = @transform_1, window_bounds = array<i64: 2, 1, 1, 256>}]} {
    %c0 = arith.constant 0 : index
    %c0_0 = arith.constant 0 : index
    %c0_1 = arith.constant 0 : index
    %c0_2 = arith.constant 0 : index
    %0 = vector.load %arg5[%c0, %c0_0, %c0_1, %c0_2] : memref<2x1x1x256xf32, #tpu.memory_space<vmem>>, vector<2x1x1x256xf32>
    %1 = vector.shape_cast %0 : vector<2x1x1x256xf32> to vector<2x1x256xf32>
    %2 = arith.index_cast %arg2 : i32 to index
    %3 = memref.load %arg3[%2] : memref<4xf32, #tpu.memory_space<smem>>
    %4 = vector.broadcast %3 : f32 to vector<2x1x256xf32>
    %5 = arith.mulf %1, %4 : vector<2x1x256xf32>
    %6 = arith.index_cast %arg2 : i32 to index
    %7 = memref.load %arg4[%6] : memref<4xf32, #tpu.memory_space<smem>>
    %8 = vector.broadcast %7 : f32 to vector<2x1x256xf32>
    %9 = arith.addf %5, %8 : vector<2x1x256xf32>
    %c0_3 = arith.constant 0 : index
    %c0_4 = arith.constant 0 : index
    %c0_5 = arith.constant 0 : index
    %c0_6 = arith.constant 0 : index
    %10 = vector.load %arg6[%c0_3, %c0_4, %c0_5, %c0_6] : memref<2x1x1x256xf32, #tpu.memory_space<vmem>>, vector<2x1x1x256xf32>
    %11 = vector.shape_cast %10 : vector<2x1x1x256xf32> to vector<2x1x256xf32>
    %12 = vector.shape_cast %9 : vector<2x1x256xf32> to vector<2x1x1x256xf32>
    tpu.vector_store %arg6[%c0_3, %c0_4, %c0_5, %c0_6], %12 {strides = array<i32>} : memref<2x1x1x256xf32, #tpu.memory_space<vmem>>, vector<2x1x1x256xf32>,
    return
  }
  func.func @transform_0(%arg0: i32, %arg1: i32, %arg2: i32, %arg3: memref<4xf32, #tpu.memory_space<smem>>, %arg4: memref<4xf32, #tpu.memory_space<smem>>) -> (i32, i32, i32, i32) {
    %c0_i32 = arith.constant 0 : i32
    %c0_i32_0 = arith.constant 0 : i32
    return %arg0, %arg2, %arg1, %c0_i32 : i32, i32, i32, i32
  }
  func.func @transform_1(%arg0: i32, %arg1: i32, %arg2: i32, %arg3: memref<4xf32, #tpu.memory_space<smem>>, %arg4: memref<4xf32, #tpu.memory_space<smem>>) -> (i32, i32, i32, i32) {
    %c0_i32 = arith.constant 0 : i32
    %c0_i32_0 = arith.constant 0 : i32
    return %arg0, %arg2, %arg1, %c0_i32 : i32, i32, i32, i32
  }
}

</mosaic_0001>

<llo_original>
// kernel: tpu_custom_call.1
$region0: #{tpu_custom_call.1}
  #allocation0 [shape = 'u32[]', space=smem, size = 0x4, offset = 0x4, fixed_abs, tag = 'smem constant byte address 0x4 - core index']
  #allocation1 [shape = 'u32[144,128]{1,0:T(1,128)}', space=vmem, size = 0x12000, scoped, tag = 'internal scratch']
  #allocation2 [shape = 's32[1]{0}', space=sflag, size = 0x4, scoped, tag = 'scoped memory for tpu_custom_call.1']
  #allocation3 [shape = 'u8[512]{0}', space=smem, size = 0x200, scoped, tag = 'prefetched SMEM operand 0']
  #allocation4 [shape = 'u8[512]{0}', space=smem, size = 0x200, scoped, tag = 'prefetched SMEM operand 1']
  %s0 = inlined_call_operand.hbm [shape: f32[4], index: 0, kind: input, shape index: {}]
  %s1 = inlined_call_operand.vmem [shape: f32[4], index: 1, kind: input, shape index: {}]
  %s2 = inlined_call_operand.hbm [shape: f32[2,4,1,256], index: 2, kind: input, shape index: {}]
  %s3 = inlined_call_operand.hbm [shape: f32[2,4,1,256], index: 3, kind: output, shape index: {}]
  %s4 = sld [smem:[#allocation0]]
  $region41: #{tpu_custom_call.1} parent=0
    _
  %s6 = ssub.s32 1, %s4
  %s7 = scalar_select 0, %s6, %s4
  %9 = dma.hbm_to_smem %s0, 16, [#allocation3], [#allocation2]
  %s10 = sshll.u32 %s1, 4
  %s11 = int_to_ptr.vmem [resolvable:$true] %s10
  %13 = dma.vmem_to_smem %s11, 16, [#allocation4], [#allocation2]
  %14 = dma.done [#allocation2], 32
  %15 = sfence
  $region1: #{tpu_custom_call.1} parent=0
    #allocation5 [shape = 'u8[4096]{0}', space=vmem, size = 0x1000, scoped, tag = 'input window, operand 2']
    #allocation6 [shape = 's32[2]{0}', space=sflag, size = 0x8, scoped, tag = 'scoped memory for tpu_custom_call.1']
    #allocation7 [shape = 's32[2]{0}', space=sflag, size = 0x8, scoped, tag = 'scoped memory for tpu_custom_call.1']
    #allocation8 [shape = 'u8[4096]{0}', space=vmem, size = 0x1000, scoped, tag = 'output window, operand 0']
    %16 = vsyncpa [#allocation6], 0
    %s17 = scalar_lea.sflag [#allocation6], 1
    %18 = vsyncpa %s17, 0
    %19 = vsyncpa [#allocation7], 0
    %s20 = scalar_lea.sflag [#allocation7], 1
    %21 = vsyncpa %s20, 0
    loop: start=0, step=1, limit=6
    $region2: #{tpu_custom_call.1} parent=1 // loop_pre_header
      _
    $region3: #{tpu_custom_call.1} parent=1 // loop_header
      %s23 = sphi 0, %s27
      %p24 = scmp.ge.s32.totalorder %s23, 6
      %s30 = sphi 0, %s49
      %s31 = sphi 0, %s45
      %s32 = sphi 0, %s41
      %s33 = sphi 0, %s30
      %s34 = sphi 0, %s31
      %s35 = sphi 0, %s32
      %s36 = sphi 0, %s33
      %s37 = sphi 0, %s34
      %s38 = sphi 0, %s35
      %s56 = sphi 0, %s58
      %s59 = sphi 0, %s56
      %s60 = sphi 0, %s59
      %s76 = sphi 0, %s60
      %s86 = sphi 0, %s88
      %s89 = sphi 0, %s86
      %s90 = sphi 0, %s89
      %s106 = sphi 0, %s90
    $region4: #{tpu_custom_call.1} parent=1 // loop_header_branch
      %26 = sbr.rel (%p24) target = $region8
    $region5: #{tpu_custom_call.1} parent=1 // loop_body
      %s28 = ssub.s32 %s23, 1
      %s29 = ssub.s32 %s23, 2
      %s39 = sadd.s32 1, %s32
      %p40 = scmp.ge.s32.totalorder %s39, 4
      %s41 = scalar_select %p40, 0, %s39
      %s42 = sadd.s32 1, %s31
      %s43 = scalar_select %p40, %s42, %s31
      %p44 = scmp.ge.s32.totalorder %s43, 1
      %s45 = scalar_select %p44, 0, %s43
      %s46 = sadd.s32 1, %s30
      %s47 = scalar_select %p44, %s46, %s30
      %p48 = scmp.ge.s32.totalorder %s47, 1
      %s49 = scalar_select %p48, 0, %s47
      %s50 = ssub.s32 %s30, %s49
      %s51 = ssub.s32 %s32, %s41
      %s52 = sor.u32 %s50, %s51
      %s53 = ssub.s32 %s31, %s45
      %s54 = sor.u32 %s52, %s53
      %p55 = scmp.eq.s32.totalorder %s54, 0
      %s57 = sadd.s32 %s56, 1
      %s58 = scalar_select %p55, %s56, %s57
      %p61 = pneg %p55
      %p62 = scmp.eq.s32.totalorder %s23, 3
      %p63 = por %p61, %p62
      %p64 = scmp.ne.s32.totalorder %s56, %s59
      %p65 = scmp.eq.s32.totalorder %s23, 0
      %p66 = por %p64, %p65
      %p67 = scmp.ne.s32.totalorder %s56, %s59
      %p68 = scmp.eq.s32.totalorder %s28, 3
      %p69 = por %p67, %p68
      %p70 = scmp.ne.s32.totalorder %s59, %s60
      %p71 = scmp.eq.s32.totalorder %s28, 0
      %p72 = por %p70, %p71
      %p73 = scmp.ne.s32.totalorder %s59, %s60
      %p74 = scmp.eq.s32.totalorder %s29, 3
      %p75 = por %p73, %p74
      %p77 = scmp.ne.s32.totalorder %s60, %s76
      %p78 = scmp.eq.s32.totalorder %s29, 0
      %p79 = por %p77, %p78
      %s80 = ssub.s32 %s30, %s49
      %s81 = ssub.s32 %s32, %s41
      %s82 = sor.u32 %s80, %s81
      %s83 = ssub.s32 %s31, %s45
      %s84 = sor.u32 %s82, %s83
      %p85 = scmp.eq.s32.totalorder %s84, 0
      %s87 = sadd.s32 %s86, 1
      %s88 = scalar_select %p85, %s86, %s87
      %p91 = pneg %p85
      %p92 = scmp.eq.s32.totalorder %s23, 3
      %p93 = por %p91, %p92
      %p94 = scmp.ne.s32.totalorder %s86, %s89
      %p95 = scmp.eq.s32.totalorder %s23, 0
      %p96 = por %p94, %p95
      %p97 = scmp.ne.s32.totalorder %s86, %s89
      %p98 = scmp.eq.s32.totalorder %s28, 3
      %p99 = por %p97, %p98
      %p100 = scmp.ne.s32.totalorder %s89, %s90
      %p101 = scmp.eq.s32.totalorder %s28, 0
      %p102 = por %p100, %p101
      %p103 = scmp.ne.s32.totalorder %s89, %s90
      %p104 = scmp.eq.s32.totalorder %s29, 3
      %p105 = por %p103, %p104
      %p107 = scmp.ne.s32.totalorder %s90, %s106
      %p108 = scmp.eq.s32.totalorder %s29, 0
      %p109 = por %p107, %p108
      %p110 = scmp.le.s32.totalorder 1, %s23
      %p111 = scmp.lt.s32.totalorder %s23, 5
      %p112 = pnand %p110, %p111
      %p113 = pneg %p112
      // Predicated region
      $region9: #{tpu_custom_call.1} parent=5 // pred_check
        _
      $region10: #{tpu_custom_call.1} parent=5 // pred_check_branch
        %115 = sbr.rel (%p112) target = $region12
      $region11: #{tpu_custom_call.1} parent=5 // pred_region
        %s116 = ssub.s32 %s23, 1
      $region12: #{tpu_custom_call.1} parent=5 // pred_fallthru
        _
      %p117 = scmp.lt.s32.totalorder %s23, 4
      // Predicated region
      $region13: #{tpu_custom_call.1} parent=5 // pred_check
        %p118 = pneg %p117
      $region14: #{tpu_custom_call.1} parent=5 // pred_check_branch
        %120 = sbr.rel (%p118) target = $region16
      $region15: #{tpu_custom_call.1} parent=5 // pred_region
        // Predicated region
        $region17: #{tpu_custom_call.1} parent=15 // pred_check
          %p121 = pneg %p66
        $region18: #{tpu_custom_call.1} parent=15 // pred_check_branch
          %123 = sbr.rel (%p121) target = $region20
        $region19: #{tpu_custom_call.1} parent=15 // pred_region
          %s124 = sand.u32 %s56, 1
          %s125 = scalar_lea.sflag [#allocation6], %s124
          %s126 = sand.u32 %s56, 1
          %s127 = smul.addr %s126, 4
          %s128 = scalar_lea.vmem [#allocation5], %s127
          %s129 = smul.u32 2, %s30
          %s131 = ssub.s32 64, 64
          %132 = vsyncadd %s125, %s131
          %s133 = smul.addr %s31, 2
          %s134 = smul.addr %s32, 2
          %s135 = sadd.s32 %s133, %s134
          %s136 = smul.addr %s129, 8
          %s137 = sadd.s32 %s135, %s136
          %s138 = smul.addr %s137, 16
          %s139 = scalar_lea.hbm %s2, %s138
          %s140 = sshll.u32 %s128, 4
          %s141 = int_to_ptr.vmem [resolvable:$true] %s140
          %146 = dma.hbm_to_vmem [thread:$0]  %s139, 64, %s141, %s125, 128, 32, 2
        $region20: #{tpu_custom_call.1} parent=15 // pred_fallthru
          _
      $region16: #{tpu_custom_call.1} parent=5 // pred_fallthru
        _
      %p147 = scmp.le.s32.totalorder 1, %s23
      %p148 = scmp.lt.s32.totalorder %s23, 5
      %p149 = pnand %p147, %p148
      %p150 = pneg %p149
      // Predicated region
      $region21: #{tpu_custom_call.1} parent=5 // pred_check
        _
      $region22: #{tpu_custom_call.1} parent=5 // pred_check_branch
        %152 = sbr.rel (%p149) target = $region24
      $region23: #{tpu_custom_call.1} parent=5 // pred_region
        %s153 = ssub.s32 %s23, 1
        %s154 = sand.u32 %s59, 1
        %s155 = scalar_lea.sflag [#allocation6], %s154
        %s156 = sand.u32 %s59, 1
        %s157 = smul.addr %s156, 4
        %s158 = scalar_lea.vmem [#allocation5], %s157
        // Predicated region
        $region25: #{tpu_custom_call.1} parent=23 // pred_check
          %p159 = pneg %p72
        $region26: #{tpu_custom_call.1} parent=23 // pred_check_branch
          %161 = sbr.rel (%p159) target = $region28
        $region27: #{tpu_custom_call.1} parent=23 // pred_region
          %162 = dma.done %s155, 64
        $region28: #{tpu_custom_call.1} parent=23 // pred_fallthru
          _
        %s163 = sand.u32 %s59, 1
        %s164 = scalar_lea.sflag [#allocation6], %s163
        %s165 = sand.u32 %s59, 1
        %s166 = smul.addr %s165, 4
        %s167 = scalar_lea.vmem [#allocation5], %s166
        %p168 = pneg %p72
        %p169 = pneg %p69
        %p170 = pneg %p102
        %p171 = pneg %p99
        %s172 = sand.u32 %s89, 1
        %s173 = scalar_lea.sflag [#allocation7], %s172
        %s174 = sand.u32 %s89, 1
        %s175 = smul.addr %s174, 4
        %s176 = scalar_lea.vmem [#allocation8], %s175
        %s177 = smul.u32 2, %s33
        %s178 = smul.u32 2, %s33
        %v179 = vld [vmem:[%s158] sm:$0x3]
        %v180 = vld [vmem:[%s158 + $0x2] sm:$0x3]
        %s181 = sld [smem:[#allocation3 + %s35]]
        %v182 = vstv %s181
        %v183 = vmul.f32 %v179, %v182
        %v184 = vmul.f32 %v180, %v182
        %s185 = sld [smem:[#allocation4 + %s35]]
        %v186 = vstv %s185
        %v187 = vadd.f32 %v183, %v186
        %v188 = vadd.f32 %v184, %v186
        %v189 = vlaneseq
        %vm190 = vcmp.ge.s32.totalorder %v189, 0
        %vm191 = vcmp.lt.s32.totalorder %v189, 256
        %vm192 = vmand %vm190, %vm191
        %193 = vst.msk [vmem:[%s176] sm:$0x3] %vm192, %v187
        %194 = vst.msk [vmem:[%s176 + $0x2] sm:$0x3] %vm192, %v188
        %s195 = sand.u32 %s89, 1
        %s196 = scalar_lea.sflag [#allocation7], %s195
        %s197 = sand.u32 %s89, 1
        %s198 = smul.addr %s197, 4
        %s199 = scalar_lea.vmem [#allocation8], %s198
        // Predicated region
        $region29: #{tpu_custom_call.1} parent=23 // pred_check
          %p200 = pneg %p99
        $region30: #{tpu_custom_call.1} parent=23 // pred_check_branch
          %202 = sbr.rel (%p200) target = $region32
        $region31: #{tpu_custom_call.1} parent=23 // pred_region
          %s203 = smul.u32 2, %s33
          %s205 = ssub.s32 64, 64
          %206 = vsyncadd %s196, %s205
          %s207 = smul.addr %s34, 2
          %s208 = smul.addr %s35, 2
          %s209 = sadd.s32 %s207, %s208
          %s210 = smul.addr %s203, 8
          %s211 = sadd.s32 %s209, %s210
          %s212 = smul.addr %s211, 16
          %s213 = scalar_lea.hbm %s3, %s212
          %s214 = sshll.u32 %s199, 4
          %s215 = int_to_ptr.vmem [resolvable:$true] %s214
          %220 = dma.vmem_to_hbm [thread:$0]  %s215, 64, %s213, %s196, 32, 128, 2
        $region32: #{tpu_custom_call.1} parent=23 // pred_fallthru
          _
      $region24: #{tpu_custom_call.1} parent=5 // pred_fallthru
        _
      %p221 = scmp.le.s32.totalorder 2, %s23
      // Predicated region
      $region33: #{tpu_custom_call.1} parent=5 // pred_check
        %p222 = pneg %p221
      $region34: #{tpu_custom_call.1} parent=5 // pred_check_branch
        %224 = sbr.rel (%p222) target = $region36
      $region35: #{tpu_custom_call.1} parent=5 // pred_region
        %s225 = ssub.s32 %s23, 2
        // Predicated region
        $region37: #{tpu_custom_call.1} parent=35 // pred_check
          %p226 = pneg %p105
        $region38: #{tpu_custom_call.1} parent=35 // pred_check_branch
          %228 = sbr.rel (%p226) target = $region40
        $region39: #{tpu_custom_call.1} parent=35 // pred_region
          %s229 = sand.u32 %s90, 1
          %s230 = scalar_lea.sflag [#allocation7], %s229
          %s231 = sand.u32 %s90, 1
          %s232 = smul.addr %s231, 4
          %s233 = scalar_lea.vmem [#allocation8], %s232
          %234 = dma.done %s230, 64
        $region40: #{tpu_custom_call.1} parent=35 // pred_fallthru
          _
      $region36: #{tpu_custom_call.1} parent=5 // pred_fallthru
        _
    $region6: #{tpu_custom_call.1} parent=1 // loop_footer
      %s27 = sadd.s32 1, %s23
    $region7: #{tpu_custom_call.1} parent=1 // loop_footer_branch
      %22 = sbr.rel target = $region3
    $region8: #{tpu_custom_call.1} parent=1 // loop_exit
      _
    %235 = vsyncpa [#allocation6], 1
    %s236 = scalar_lea.sflag [#allocation6], 1
    %237 = vsyncpa %s236, 1
    %238 = vsyncpa [#allocation7], 1
    %s239 = scalar_lea.sflag [#allocation7], 1
    %240 = vsyncpa %s239, 1

</llo_original>
